<compile_context>
chip_gen: v5e
topology: v5e:2x2
jax: 0.10.0
libtpu: 0.0.40
codegen_flags: <defaults>
</compile_context>

<pallas_src>
import jax
import jax.numpy as jnp
from jax.experimental import pallas as pl
from jax.experimental.pallas import tpu as pltpu


def _copy_kernel(x_ref, o_ref):
    # Pure pass-through: one full-width unmasked VMEM copy per block.
    o_ref[...] = x_ref[...]


# Packed-sublane multiple per element size: keeps the store path unmasked for
# sub-32-bit dtypes (bf16 packs 16 rows / vreg, int8/fp8 pack 32).
_SUBLANE_BY_ITEMSIZE = {4: 8, 2: 16, 1: 32}

# 4 buffers x 8 MiB (in + out, double-buffered) = 32 MiB, plus headroom for
# internal scratch.  40 MiB is below v7x's 64 MiB physical VMEM and well below
# v5e/v6e's 128 MiB.
_VMEM_LIMIT_BYTES = 40 * 1024 * 1024


def identity(x, *, materialize=False, block_bytes=8 * 1024 * 1024):
    """Identity: returns a tensor equal to x (same shape & dtype).

    materialize=False (default): return x itself -- the optimal Identity.
    materialize=True: produce a fresh buffer via a Pallas streaming copy.
    """
    if not materialize:
        # Optimal implementation: no kernel, no HBM traffic.
        return x

    n = x.size
    if n == 0:
        return x

    itemsize = x.dtype.itemsize
    sub = _SUBLANE_BY_ITEMSIZE.get(itemsize, 8)

    # Lane-dense 2D view: widest column count (multiple of 128) such that the
    # resulting row count is a multiple of the packed sublane count.
    cols = None
    for c in (1024, 512, 256, 128):
        if n % (sub * c) == 0:
            cols = c
            break

    if cols is None:
        # Ragged total size: copy the whole array as a single full-extent
        # block if it comfortably fits VMEM; otherwise fall back to the
        # optimal no-op (values are identical either way).
        if n * itemsize <= 4 * 1024 * 1024:
            x2d = x.reshape(1, n)
            out = pl.pallas_call(
                _copy_kernel,
                out_shape=jax.ShapeDtypeStruct((1, n), x.dtype),
                grid_spec=pltpu.PrefetchScalarGridSpec(
                    num_scalar_prefetch=0,
                    grid=(1,),
                    in_specs=[pl.BlockSpec((1, n), lambda i: (0, 0))],
                    out_specs=pl.BlockSpec((1, n), lambda i: (0, 0)),
                ),
                compiler_params=pltpu.CompilerParams(
                    dimension_semantics=("arbitrary",),
                    vmem_limit_bytes=_VMEM_LIMIT_BYTES,
                ),
                cost_estimate=pl.CostEstimate(
                    flops=0, transcendentals=0, bytes_accessed=2 * n * itemsize
                ),
            )(x2d)
            return out.reshape(x.shape)
        # TODO(synk): masked tail-block path for large ragged sizes.
        return x

    rows = n // cols
    x2d = x.reshape(rows, cols)
    m = rows // sub  # row count in sublane-group units (rows % sub == 0)

    # Largest divisor of m whose block fits block_bytes.  A divisor (rather
    # than cdiv + masked tail) keeps every store full-width and every DMA
    # full-sized.  Exclude m itself when m >= 2 so the grid has at least two
    # steps (lets both v7x TensorCores pull HBM in parallel).
    target_d = max(1, block_bytes // (sub * cols * itemsize))
    d = 1
    for cand in range(min(target_d, m), 0, -1):
        if m >= 2 and cand == m:
            continue
        if m % cand == 0:
            d = cand
            break
    block_rows = d * sub
    grid = rows // block_rows

    out2d = pl.pallas_call(
        _copy_kernel,
        out_shape=jax.ShapeDtypeStruct((rows, cols), x.dtype),
        grid_spec=pltpu.PrefetchScalarGridSpec(
            num_scalar_prefetch=0,
            grid=(grid,),
            in_specs=[pl.BlockSpec((block_rows, cols), lambda i: (i, 0))],
            out_specs=pl.BlockSpec((block_rows, cols), lambda i: (i, 0)),
        ),
        compiler_params=pltpu.CompilerParams(
            dimension_semantics=("parallel",),
            vmem_limit_bytes=_VMEM_LIMIT_BYTES,
        ),
        cost_estimate=pl.CostEstimate(
            flops=0, transcendentals=0, bytes_accessed=2 * n * itemsize
        ),
    )(x2d)

    return out2d.reshape(x.shape)


if __name__ == "__main__":
    key = jax.random.PRNGKey(0)

    # Small NCHW input consistent with a CNN forward: batch=2, channels=4, 16x16.
    x = jax.random.normal(key, (2, 4, 16, 16), dtype=jnp.float32)

    # Default (optimal) path: pure pass-through, no kernel launch.
    y_fast = identity(x)
    jax.block_until_ready(y_fast)
    assert y_fast.shape == x.shape and y_fast.dtype == x.dtype
    assert bool(jnp.all(y_fast == x))

    # Kernel path: materialize a fresh buffer via the Pallas copy.
    y = identity(x, materialize=True)
    jax.block_until_ready(y)
    assert y.shape == x.shape and y.dtype == x.dtype
    assert bool(jnp.all(y == x))

    # Larger f32 case: exercises the divisor-based tiling and a grid >= 2.
    x2 = jax.random.normal(jax.random.PRNGKey(1), (8, 64, 64, 64), dtype=jnp.float32)
    y2 = identity(x2, materialize=True)
    jax.block_until_ready(y2)
    assert y2.shape == x2.shape and bool(jnp.all(y2 == x2))

    # bf16 case: exercises the dtype-aware 16-row sublane multiple.
    x3 = jax.random.normal(jax.random.PRNGKey(2), (2, 8, 16, 16)).astype(jnp.bfloat16)
    y3 = identity(x3, materialize=True)
    jax.block_until_ready(y3)
    assert y3.shape == x3.shape and y3.dtype == x3.dtype
    assert bool(jnp.all(y3 == x3))

    # Ragged total size: single full-extent block copy.
    x4 = jax.random.normal(jax.random.PRNGKey(3), (3, 5, 7), dtype=jnp.float32)
    y4 = identity(x4, materialize=True)
    jax.block_until_ready(y4)
    assert y4.shape == x4.shape and bool(jnp.all(y4 == x4))

    print("KERNEL_OK")
</pallas_src>

<mosaic_0001>
module attributes {stable_mosaic.version = 11 : i64} {
  func.func @_copy_kernel(%arg0: i32, %arg1: memref<8x256xf32, #tpu.memory_space<vmem>>, %arg2: memref<8x256xf32, #tpu.memory_space<vmem>>) attributes {dimension_semantics = [#tpu.dimension_semantics<parallel>], iteration_bounds = array<i64: 1>, scalar_prefetch = 0 : i64, scratch_operands = 0 : i64, tpu.core_type = #tpu.core_type<tc>, window_params = [{transform_indices = @transform_0, window_bounds = array<i64: 8, 256>}, {transform_indices = @transform_1, window_bounds = array<i64: 8, 256>}]} {
    %c0 = arith.constant 0 : index
    %c0_0 = arith.constant 0 : index
    %0 = vector.load %arg1[%c0, %c0_0] : memref<8x256xf32, #tpu.memory_space<vmem>>, vector<8x256xf32>
    %c0_1 = arith.constant 0 : index
    %c0_2 = arith.constant 0 : index
    %1 = vector.load %arg2[%c0_1, %c0_2] : memref<8x256xf32, #tpu.memory_space<vmem>>, vector<8x256xf32>
    tpu.vector_store %arg2[%c0_1, %c0_2], %0 {strides = array<i32>} : memref<8x256xf32, #tpu.memory_space<vmem>>, vector<8x256xf32>,
    return
  }
  func.func @transform_0(%arg0: i32) -> (i32, i32) {
    %c0_i32 = arith.constant 0 : i32
    %c0_i32_0 = arith.constant 0 : i32
    return %arg0, %c0_i32 : i32, i32
  }
  func.func @transform_1(%arg0: i32) -> (i32, i32) {
    %c0_i32 = arith.constant 0 : i32
    %c0_i32_0 = arith.constant 0 : i32
    return %arg0, %c0_i32 : i32, i32
  }
}

</mosaic_0001>

<llo_original>
// kernel: tpu_custom_call.1
$region0: #{tpu_custom_call.1}
  #allocation0 [shape = 'u32[]', space=smem, size = 0x4, offset = 0x4, fixed_abs, tag = 'smem constant byte address 0x4 - core index']
  #allocation1 [shape = 'u32[72,128]{1,0:T(1,128)}', space=vmem, size = 0x9000, scoped, tag = 'internal scratch']
  %s0 = inlined_call_operand.hbm [shape: f32[8,256], index: 0, kind: input, shape index: {}]
  %s1 = inlined_call_operand.hbm [shape: f32[8,256], index: 1, kind: output, shape index: {}]
  %s2 = sld [smem:[#allocation0]]
  $region18: #{tpu_custom_call.1} parent=0
    _
  %s4 = ssub.s32 1, %s2
  %s5 = scalar_select 0, %s4, %s2
  $region1: #{tpu_custom_call.1} parent=0
    #allocation2 [shape = 'u8[8192]{0}', space=vmem, size = 0x2000, scoped, tag = 'input window, operand 0, single buffered']
    #allocation3 [shape = 's32[1]{0}', space=sflag, size = 0x4, scoped, tag = 'scoped memory for tpu_custom_call.1']
    #allocation4 [shape = 's32[1]{0}', space=sflag, size = 0x4, scoped, tag = 'scoped memory for tpu_custom_call.1']
    #allocation5 [shape = 'u8[8192]{0}', space=vmem, size = 0x2000, scoped, tag = 'output window, operand 0, single buffered']
    %6 = vsyncpa [#allocation3], 0
    %7 = vsyncpa [#allocation4], 0
    // Predicated region
    $region2: #{tpu_custom_call.1} parent=1 // pred_check
      _
    $region3: #{tpu_custom_call.1} parent=1 // pred_check_branch
      %9 = sbr.rel (0) target = $region5
    $region4: #{tpu_custom_call.1} parent=1 // pred_region
      %11 = vsyncadd [#allocation3], 0
      %s13 = sshll.u32 %s0, 4
      %s14 = int_to_ptr.hbm [resolvable:$true] %s13
      %s15 = sshll.u32 [#allocation2], 4
      %s16 = int_to_ptr.vmem [resolvable:$true] %s15
      %18 = dma.hbm_to_vmem [thread:$0]  %s14, 256, %s16, [#allocation3]
    $region5: #{tpu_custom_call.1} parent=1 // pred_fallthru
      _
    // Predicated region
    $region6: #{tpu_custom_call.1} parent=1 // pred_check
      _
    $region7: #{tpu_custom_call.1} parent=1 // pred_check_branch
      %20 = sbr.rel (0) target = $region9
    $region8: #{tpu_custom_call.1} parent=1 // pred_region
      %22 = dma.done [#allocation3], 256
    $region9: #{tpu_custom_call.1} parent=1 // pred_fallthru
      _
    %v23 = vld [vmem:[#allocation2] sm:$0xff]
    %v24 = vld [vmem:[#allocation2 + $0x8] sm:$0xff]
    %25 = vst [vmem:[#allocation5] sm:$0xff] %v23
    %26 = vst [vmem:[#allocation5 + $0x8] sm:$0xff] %v24
    // Predicated region
    $region10: #{tpu_custom_call.1} parent=1 // pred_check
      _
    $region11: #{tpu_custom_call.1} parent=1 // pred_check_branch
      %28 = sbr.rel (0) target = $region13
    $region12: #{tpu_custom_call.1} parent=1 // pred_region
      %30 = vsyncadd [#allocation4], 0
      %s32 = sshll.u32 [#allocation5], 4
      %s33 = int_to_ptr.vmem [resolvable:$true] %s32
      %s34 = sshll.u32 %s1, 4
      %s35 = int_to_ptr.hbm [resolvable:$true] %s34
      %37 = dma.vmem_to_hbm [thread:$0]  %s33, 256, %s35, [#allocation4]
    $region13: #{tpu_custom_call.1} parent=1 // pred_fallthru
      _
    // Predicated region
    $region14: #{tpu_custom_call.1} parent=1 // pred_check
      _
    $region15: #{tpu_custom_call.1} parent=1 // pred_check_branch
      %39 = sbr.rel (0) target = $region17
    $region16: #{tpu_custom_call.1} parent=1 // pred_region
      %41 = dma.done [#allocation4], 256
    $region17: #{tpu_custom_call.1} parent=1 // pred_fallthru
      _
    %42 = vsyncpa [#allocation3], 1
    %43 = vsyncpa [#allocation4], 1

</llo_original>
